<compile_context>
chip_gen: v7x
topology: tpu7x:2x2x1
jax: 0.10.0
libtpu: 0.0.40
codegen_flags: <defaults>
</compile_context>

<pallas_src>
import functools

import jax
import jax.numpy as jnp
from jax.experimental import pallas as pl
from jax.experimental.pallas import tpu as pltpu

LN_EPS = 1e-5


def _round_up(a, m):
    return (a + m - 1) // m * m


def _sigmoid(v):
    # tanh lowers to the EUP slot; avoids the VALU divide of 1/(1+exp(-x)).
    return 0.5 * jnp.tanh(0.5 * v) + 0.5


def gru_kernel(x_ref, hx_ref, wx_ref, wh_ref, pp_ref, out_ref, *, hidden, hidden_pad):
    H, HP = hidden, hidden_pad

    # Two wide MXU matmuls replace the original six narrow ones. Operands keep
    # their native dtype (bf16 feeds the MXU directly); accumulate in f32.
    gx = jnp.dot(x_ref[...], wx_ref[...], preferred_element_type=jnp.float32)   # (TB, 5*HP)
    gh = jnp.dot(hx_ref[...], wh_ref[...], preferred_element_type=jnp.float32)  # (TB, 4*HP)

    pp = pp_ref[...].astype(jnp.float32)   # (8, HP) packed Ch bias + LN gamma/beta
    ch_b = pp[0:1, :]
    gr, br = pp[1:2, :], pp[2:3, :]
    gz, bz = pp[3:4, :], pp[4:5, :]
    gl, bl = pp[5:6, :], pp[6:7, :]

    if H == HP:
        def ln(y, g, b):
            mu = jnp.mean(y, axis=-1, keepdims=True)
            d = y - mu
            var = jnp.mean(d * d, axis=-1, keepdims=True)
            return d * jax.lax.rsqrt(var + LN_EPS) * g + b
    else:
        # Hidden dim is lane-padded to HP; LayerNorm stats only over real H cols.
        col = jax.lax.broadcasted_iota(jnp.int32, (1, HP), 1)
        mask = (col < H).astype(jnp.float32)
        inv_h = jnp.float32(1.0 / H)

        def ln(y, g, b):
            ym = y * mask
            mu = jnp.sum(ym, axis=-1, keepdims=True) * inv_h
            d = (ym - mu) * mask
            var = jnp.sum(d * d, axis=-1, keepdims=True) * inv_h
            return d * jax.lax.rsqrt(var + LN_EPS) * g + b

    r = _sigmoid(ln(gx[:, 0 * HP:1 * HP] + gh[:, 0 * HP:1 * HP], gr, br))
    z = _sigmoid(ln(gx[:, 1 * HP:2 * HP] + gh[:, 1 * HP:2 * HP], gz, bz))
    l = _sigmoid(ln(gx[:, 2 * HP:3 * HP] + gh[:, 2 * HP:3 * HP], gl, bl))

    ch = gh[:, 3 * HP:4 * HP] + ch_b                      # Ch(hx)
    n = jnp.tanh(gx[:, 3 * HP:4 * HP] + r * ch)           # tanh(x@Cx + r*Ch(hx))
    n = n + l * gx[:, 4 * HP:5 * HP]                      # + l * (x @ linear_transform)
    # TODO(synk): Dropout(0.3) on the candidate is identity in eval mode; a
    # train-mode mask would need pltpu.prng_seed/prng_random_bits.

    hxf = hx_ref[...].astype(jnp.float32)
    out_ref[...] = ((1.0 - z) * hxf + z * n).astype(out_ref.dtype)


def init_params(key, input_units, hidden_units, dtype=jnp.float32):
    cat_units = input_units + hidden_units
    ks = jax.random.split(key, 8)
    s = 0.1
    return {
        "reset_gate": s * jax.random.normal(ks[0], (cat_units, hidden_units), dtype),
        "update_gate": s * jax.random.normal(ks[1], (cat_units, hidden_units), dtype),
        "linear_gate": s * jax.random.normal(ks[2], (cat_units, hidden_units), dtype),
        "linear_transform": s * jax.random.normal(ks[3], (input_units, hidden_units), dtype),
        "Cx": s * jax.random.normal(ks[4], (input_units, hidden_units), dtype),
        "Ch_w": s * jax.random.normal(ks[5], (hidden_units, hidden_units), dtype),  # (out, in)
        "Ch_b": s * jax.random.normal(ks[6], (hidden_units,), dtype),
        "reset_norm_g": jnp.ones((hidden_units,), dtype),
        "reset_norm_b": jnp.zeros((hidden_units,), dtype),
        "update_norm_g": jnp.ones((hidden_units,), dtype),
        "update_norm_b": jnp.zeros((hidden_units,), dtype),
        "linear_norm_g": jnp.ones((hidden_units,), dtype),
        "linear_norm_b": jnp.zeros((hidden_units,), dtype),
    }


def prepare_params(params, input_units, hidden_units):
    """One-time repack of the PyTorch-style parameters into fused kernel operands.

    Call once, outside the per-step hot path (weights are transposed/concatenated/
    lane-padded here, never per call)."""
    IN, H = input_units, hidden_units
    HP = _round_up(H, 128)

    def padc(w):   # pad output columns H -> HP with zeros
        return jnp.pad(w, ((0, 0), (0, HP - H)))

    wr, wz, wl = params["reset_gate"], params["update_gate"], params["linear_gate"]
    wx = jnp.concatenate(
        [padc(wr[:IN]), padc(wz[:IN]), padc(wl[:IN]),
         padc(params["Cx"]), padc(params["linear_transform"])], axis=1)        # (IN, 5*HP)
    wh = jnp.concatenate(
        [padc(wr[IN:]), padc(wz[IN:]), padc(wl[IN:]),
         padc(params["Ch_w"].T)], axis=1)                                      # (H, 4*HP)
    wh = jnp.pad(wh, ((0, HP - H), (0, 0)))                                    # (HP, 4*HP)

    def padv(v):
        return jnp.pad(v, (0, HP - H))

    packed = jnp.stack(
        [padv(params["Ch_b"]),
         padv(params["reset_norm_g"]), padv(params["reset_norm_b"]),
         padv(params["update_norm_g"]), padv(params["update_norm_b"]),
         padv(params["linear_norm_g"]), padv(params["linear_norm_b"]),
         jnp.zeros((HP,), wx.dtype)], axis=0)                                  # (8, HP)
    return wx, wh, packed


@functools.partial(jax.jit, static_argnames=("hidden_units",))
def linear_enhanced_gru(x, hx, wx, wh, packed, *, hidden_units):
    B, IN = x.shape
    H = hidden_units
    HP = wh.shape[0]
    dtype = x.dtype

    if hx is None:
        hx = jnp.zeros((B, H), dtype=dtype)
    hx = hx[:B]

    # --- batch tiling -------------------------------------------------------
    B8 = _round_up(B, 8)
    tb_cap = 256 if HP <= 512 else 128        # bigger tile when intermediates are cheap
    TB = min(tb_cap, B8)
    if B8 >= 16 and B8 // TB < 2:
        # split into >= 2 parallel programs so both v7x TensorCores get work
        TB = _round_up(-(-B8 // 2), 8)
    BP = _round_up(B8, TB)
    grid = (BP // TB,)

    # pads are no-ops when shapes are already aligned
    xp = jnp.pad(x, ((0, BP - B), (0, 0)))
    hxp = jnp.pad(hx, ((0, BP - B), (0, HP - H)))

    # --- explicit VMEM budget -----------------------------------------------
    itm = jnp.dtype(dtype).itemsize
    w_bytes = (wx.size + wh.size + packed.size) * jnp.dtype(wx.dtype).itemsize
    a_bytes = 2 * TB * (IN + 2 * HP) * itm + 3 * TB * 9 * HP * 4
    vmem_limit = int(min(max(2 * w_bytes + a_bytes, 8 << 20), 64 << 20))
    # TODO(synk): for very large H the fused resident weights exceed VMEM; a
    # K-tiled grid axis with an f32 accumulator would be needed there.

    kernel = functools.partial(gru_kernel, hidden=H, hidden_pad=HP)
    out = pl.pallas_call(
        kernel,
        out_shape=jax.ShapeDtypeStruct((BP, HP), dtype),
        grid_spec=pltpu.PrefetchScalarGridSpec(
            num_scalar_prefetch=0,
            grid=grid,
            in_specs=[
                pl.BlockSpec((TB, IN), lambda i: (i, 0)),       # x tile
                pl.BlockSpec((TB, HP), lambda i: (i, 0)),       # hx tile
                pl.BlockSpec((IN, 5 * HP), lambda i: (0, 0)),   # fused x-side weights (resident)
                pl.BlockSpec((HP, 4 * HP), lambda i: (0, 0)),   # fused h-side weights (resident)
                pl.BlockSpec((8, HP), lambda i: (0, 0)),        # packed Ch bias + LN params
            ],
            out_specs=pl.BlockSpec((TB, HP), lambda i: (i, 0)),
        ),
        compiler_params=pltpu.CompilerParams(
            dimension_semantics=("parallel",),
            vmem_limit_bytes=vmem_limit,
        ),
    )(xp, hxp, wx, wh, packed)
    return out[:B, :H]


def reference(x, hx, params):
    """Pure-JAX reference matching the PyTorch forward (eval mode)."""
    if hx is None:
        hx = jnp.zeros((x.shape[0], params["Ch_b"].shape[0]), dtype=x.dtype)
    hx = hx[: x.shape[0]]
    xh = jnp.concatenate([x, hx], axis=-1)

    def ln(y, g, b):
        mu = jnp.mean(y, axis=-1, keepdims=True)
        var = jnp.mean(jnp.square(y - mu), axis=-1, keepdims=True)
        return (y - mu) / jnp.sqrt(var + LN_EPS) * g + b

    r = jax.nn.sigmoid(ln(xh @ params["reset_gate"], params["reset_norm_g"], params["reset_norm_b"]))
    z = jax.nn.sigmoid(ln(xh @ params["update_gate"], params["update_norm_g"], params["update_norm_b"]))
    l = jax.nn.sigmoid(ln(xh @ params["linear_gate"], params["linear_norm_g"], params["linear_norm_b"]))
    n = x @ params["Cx"] + r * (hx @ params["Ch_w"].T + params["Ch_b"])
    n = jnp.tanh(n) + l * (x @ params["linear_transform"])
    return (1.0 - z) * hx + z * n


if __name__ == "__main__":
    IN, H = 16, 32
    key = jax.random.PRNGKey(0)
    kx, kh, kp, kx2 = jax.random.split(key, 4)

    params = init_params(kp, IN, H)
    wx, wh, packed = prepare_params(params, IN, H)   # one-time weight repack

    # config 1: ragged batch (exercises batch + lane padding), explicit hx
    B1 = 6
    x1 = jax.random.normal(kx, (B1, IN), jnp.float32)
    hx1 = jax.random.normal(kh, (B1, H), jnp.float32)
    out1 = jax.block_until_ready(linear_enhanced_gru(x1, hx1, wx, wh, packed, hidden_units=H))
    ref1 = reference(x1, hx1, params)
    assert out1.shape == (B1, H)
    assert jnp.allclose(out1, ref1, atol=1e-4, rtol=1e-4), "mismatch vs reference (cfg1)"

    # config 2: larger batch (multi-program grid), hx defaults to zeros
    B2 = 40
    x2 = jax.random.normal(kx2, (B2, IN), jnp.float32)
    out2 = jax.block_until_ready(linear_enhanced_gru(x2, None, wx, wh, packed, hidden_units=H))
    ref2 = reference(x2, None, params)
    assert out2.shape == (B2, H)
    assert jnp.allclose(out2, ref2, atol=1e-4, rtol=1e-4), "mismatch vs reference (cfg2)"

    print("KERNEL_OK")
</pallas_src>

<mosaic_0001>
module attributes {stable_mosaic.version = 11 : i64} {
  func.func @gru_kernel(%arg0: i32, %arg1: memref<8x16xf32, #tpu.memory_space<vmem>>, %arg2: memref<8x128xf32, #tpu.memory_space<vmem>>, %arg3: memref<16x640xf32, #tpu.memory_space<vmem>>, %arg4: memref<128x512xf32, #tpu.memory_space<vmem>>, %arg5: memref<8x128xf32, #tpu.memory_space<vmem>>, %arg6: memref<8x128xf32, #tpu.memory_space<vmem>>) attributes {dimension_semantics = [#tpu.dimension_semantics<parallel>], iteration_bounds = array<i64: 1>, scalar_prefetch = 0 : i64, scratch_operands = 0 : i64, tpu.core_type = #tpu.core_type<tc>, window_params = [{transform_indices = @transform_0, window_bounds = array<i64: 8, 16>}, {transform_indices = @transform_1, window_bounds = array<i64: 8, 128>}, {pipeline_mode = #tpu.pipeline_mode<synchronous>, transform_indices = @transform_2, window_bounds = array<i64: 16, 640>}, {pipeline_mode = #tpu.pipeline_mode<synchronous>, transform_indices = @transform_3, window_bounds = array<i64: 128, 512>}, {pipeline_mode = #tpu.pipeline_mode<synchronous>, transform_indices = @transform_4, window_bounds = array<i64: 8, 128>}, {transform_indices = @transform_5, window_bounds = array<i64: 8, 128>}]} {
    %c0 = arith.constant 0 : index
    %c0_0 = arith.constant 0 : index
    %0 = vector.load %arg1[%c0, %c0_0] : memref<8x16xf32, #tpu.memory_space<vmem>>, vector<8x16xf32>
    %c0_1 = arith.constant 0 : index
    %c0_2 = arith.constant 0 : index
    %1 = vector.load %arg3[%c0_1, %c0_2] : memref<16x640xf32, #tpu.memory_space<vmem>>, vector<16x640xf32>
    %cst = arith.constant dense<0.000000e+00> : vector<8x640xf32>
    %2 = tpu.matmul %0, %1, %cst {dimension_numbers = #tpu.dot_dimension_numbers<[1], [0], [0], [1], [0, 0, 1, 1], [], []>} : vector<8x16xf32>, vector<16x640xf32>, vector<8x640xf32> -> vector<8x640xf32>
    %c0_3 = arith.constant 0 : index
    %c0_4 = arith.constant 0 : index
    %3 = vector.load %arg2[%c0_3, %c0_4] : memref<8x128xf32, #tpu.memory_space<vmem>>, vector<8x128xf32>
    %c0_5 = arith.constant 0 : index
    %c0_6 = arith.constant 0 : index
    %4 = vector.load %arg4[%c0_5, %c0_6] : memref<128x512xf32, #tpu.memory_space<vmem>>, vector<128x512xf32>
    %cst_7 = arith.constant dense<0.000000e+00> : vector<8x512xf32>
    %5 = tpu.matmul %3, %4, %cst_7 {dimension_numbers = #tpu.dot_dimension_numbers<[1], [0], [0], [1], [0, 0, 1, 1], [], []>} : vector<8x128xf32>, vector<128x512xf32>, vector<8x512xf32> -> vector<8x512xf32>
    %c0_8 = arith.constant 0 : index
    %c0_9 = arith.constant 0 : index
    %6 = vector.load %arg5[%c0_8, %c0_9] : memref<8x128xf32, #tpu.memory_space<vmem>>, vector<8x128xf32>
    %7 = vector.extract_strided_slice %6 {offsets = [0, 0], sizes = [1, 128], strides = [1, 1]} : vector<8x128xf32> to vector<1x128xf32>
    %8 = vector.extract_strided_slice %6 {offsets = [1, 0], sizes = [1, 128], strides = [1, 1]} : vector<8x128xf32> to vector<1x128xf32>
    %9 = vector.extract_strided_slice %6 {offsets = [2, 0], sizes = [1, 128], strides = [1, 1]} : vector<8x128xf32> to vector<1x128xf32>
    %10 = vector.extract_strided_slice %6 {offsets = [3, 0], sizes = [1, 128], strides = [1, 1]} : vector<8x128xf32> to vector<1x128xf32>
    %11 = vector.extract_strided_slice %6 {offsets = [4, 0], sizes = [1, 128], strides = [1, 1]} : vector<8x128xf32> to vector<1x128xf32>
    %12 = vector.extract_strided_slice %6 {offsets = [5, 0], sizes = [1, 128], strides = [1, 1]} : vector<8x128xf32> to vector<1x128xf32>
    %13 = vector.extract_strided_slice %6 {offsets = [6, 0], sizes = [1, 128], strides = [1, 1]} : vector<8x128xf32> to vector<1x128xf32>
    %14 = tpu.iota {dimensions = array<i32: 1>} : vector<1x128xi32>
    %c32_i32 = arith.constant 32 : i32
    %15 = vector.broadcast %c32_i32 : i32 to vector<1x128xi32>
    %16 = arith.cmpi slt, %14, %15 : vector<1x128xi32>
    %17 = arith.extui %16 : vector<1x128xi1> to vector<1x128xi32>
    %18 = arith.sitofp %17 : vector<1x128xi32> to vector<1x128xf32>
    %19 = vector.extract_strided_slice %2 {offsets = [0, 0], sizes = [8, 128], strides = [1, 1]} : vector<8x640xf32> to vector<8x128xf32>
    %20 = vector.extract_strided_slice %5 {offsets = [0, 0], sizes = [8, 128], strides = [1, 1]} : vector<8x512xf32> to vector<8x128xf32>
    %21 = arith.addf %19, %20 : vector<8x128xf32>
    %22 = vector.broadcast %18 : vector<1x128xf32> to vector<8x128xf32>
    %23 = arith.mulf %21, %22 : vector<8x128xf32>
    %cst_10 = arith.constant dense<0.000000e+00> : vector<8xf32>
    %24 = vector.multi_reduction <add>, %23, %cst_10 [1] : vector<8x128xf32> to vector<8xf32>
    %25 = vector.shape_cast %24 : vector<8xf32> to vector<8x1xf32>
    %cst_11 = arith.constant 3.125000e-02 : f32
    %26 = vector.broadcast %cst_11 : f32 to vector<8x1xf32>
    %27 = arith.mulf %25, %26 : vector<8x1xf32>
    %28 = vector.broadcast %27 : vector<8x1xf32> to vector<8x128xf32>
    %29 = arith.subf %23, %28 : vector<8x128xf32>
    %30 = vector.broadcast %18 : vector<1x128xf32> to vector<8x128xf32>
    %31 = arith.mulf %29, %30 : vector<8x128xf32>
    %32 = arith.mulf %31, %31 : vector<8x128xf32>
    %cst_12 = arith.constant dense<0.000000e+00> : vector<8xf32>
    %33 = vector.multi_reduction <add>, %32, %cst_12 [1] : vector<8x128xf32> to vector<8xf32>
    %34 = vector.shape_cast %33 : vector<8xf32> to vector<8x1xf32>
    %cst_13 = arith.constant 3.125000e-02 : f32
    %35 = vector.broadcast %cst_13 : f32 to vector<8x1xf32>
    %36 = arith.mulf %34, %35 : vector<8x1xf32>
    %cst_14 = arith.constant 9.99999974E-6 : f32
    %37 = vector.broadcast %cst_14 : f32 to vector<8x1xf32>
    %38 = arith.addf %36, %37 : vector<8x1xf32>
    %39 = math.rsqrt %38 : vector<8x1xf32>
    %40 = vector.broadcast %39 : vector<8x1xf32> to vector<8x128xf32>
    %41 = arith.mulf %31, %40 : vector<8x128xf32>
    %42 = vector.broadcast %8 : vector<1x128xf32> to vector<8x128xf32>
    %43 = arith.mulf %41, %42 : vector<8x128xf32>
    %44 = vector.broadcast %9 : vector<1x128xf32> to vector<8x128xf32>
    %45 = arith.addf %43, %44 : vector<8x128xf32>
    %cst_15 = arith.constant 5.000000e-01 : f32
    %46 = vector.broadcast %cst_15 : f32 to vector<8x128xf32>
    %47 = arith.mulf %46, %45 : vector<8x128xf32>
    %48 = math.tanh %47 : vector<8x128xf32>
    %cst_16 = arith.constant 5.000000e-01 : f32
    %49 = vector.broadcast %cst_16 : f32 to vector<8x128xf32>
    %50 = arith.mulf %49, %48 : vector<8x128xf32>
    %cst_17 = arith.constant 5.000000e-01 : f32
    %51 = vector.broadcast %cst_17 : f32 to vector<8x128xf32>
    %52 = arith.addf %50, %51 : vector<8x128xf32>
    %53 = vector.extract_strided_slice %2 {offsets = [0, 128], sizes = [8, 128], strides = [1, 1]} : vector<8x640xf32> to vector<8x128xf32>
    %54 = vector.extract_strided_slice %5 {offsets = [0, 128], sizes = [8, 128], strides = [1, 1]} : vector<8x512xf32> to vector<8x128xf32>
    %55 = arith.addf %53, %54 : vector<8x128xf32>
    %56 = vector.broadcast %18 : vector<1x128xf32> to vector<8x128xf32>
    %57 = arith.mulf %55, %56 : vector<8x128xf32>
    %cst_18 = arith.constant dense<0.000000e+00> : vector<8xf32>
    %58 = vector.multi_reduction <add>, %57, %cst_18 [1] : vector<8x128xf32> to vector<8xf32>
    %59 = vector.shape_cast %58 : vector<8xf32> to vector<8x1xf32>
    %cst_19 = arith.constant 3.125000e-02 : f32
    %60 = vector.broadcast %cst_19 : f32 to vector<8x1xf32>
    %61 = arith.mulf %59, %60 : vector<8x1xf32>
    %62 = vector.broadcast %61 : vector<8x1xf32> to vector<8x128xf32>
    %63 = arith.subf %57, %62 : vector<8x128xf32>
    %64 = vector.broadcast %18 : vector<1x128xf32> to vector<8x128xf32>
    %65 = arith.mulf %63, %64 : vector<8x128xf32>
    %66 = arith.mulf %65, %65 : vector<8x128xf32>
    %cst_20 = arith.constant dense<0.000000e+00> : vector<8xf32>
    %67 = vector.multi_reduction <add>, %66, %cst_20 [1] : vector<8x128xf32> to vector<8xf32>
    %68 = vector.shape_cast %67 : vector<8xf32> to vector<8x1xf32>
    %cst_21 = arith.constant 3.125000e-02 : f32
    %69 = vector.broadcast %cst_21 : f32 to vector<8x1xf32>
    %70 = arith.mulf %68, %69 : vector<8x1xf32>
    %cst_22 = arith.constant 9.99999974E-6 : f32
    %71 = vector.broadcast %cst_22 : f32 to vector<8x1xf32>
    %72 = arith.addf %70, %71 : vector<8x1xf32>
    %73 = math.rsqrt %72 : vector<8x1xf32>
    %74 = vector.broadcast %73 : vector<8x1xf32> to vector<8x128xf32>
    %75 = arith.mulf %65, %74 : vector<8x128xf32>
    %76 = vector.broadcast %10 : vector<1x128xf32> to vector<8x128xf32>
    %77 = arith.mulf %75, %76 : vector<8x128xf32>
    %78 = vector.broadcast %11 : vector<1x128xf32> to vector<8x128xf32>
    %79 = arith.addf %77, %78 : vector<8x128xf32>
    %cst_23 = arith.constant 5.000000e-01 : f32
    %80 = vector.broadcast %cst_23 : f32 to vector<8x128xf32>
    %81 = arith.mulf %80, %79 : vector<8x128xf32>
    %82 = math.tanh %81 : vector<8x128xf32>
    %cst_24 = arith.constant 5.000000e-01 : f32
    %83 = vector.broadcast %cst_24 : f32 to vector<8x128xf32>
    %84 = arith.mulf %83, %82 : vector<8x128xf32>
    %cst_25 = arith.constant 5.000000e-01 : f32
    %85 = vector.broadcast %cst_25 : f32 to vector<8x128xf32>
    %86 = arith.addf %84, %85 : vector<8x128xf32>
    %87 = vector.extract_strided_slice %2 {offsets = [0, 256], sizes = [8, 128], strides = [1, 1]} : vector<8x640xf32> to vector<8x128xf32>
    %88 = vector.extract_strided_slice %5 {offsets = [0, 256], sizes = [8, 128], strides = [1, 1]} : vector<8x512xf32> to vector<8x128xf32>
    %89 = arith.addf %87, %88 : vector<8x128xf32>
    %90 = vector.broadcast %18 : vector<1x128xf32> to vector<8x128xf32>
    %91 = arith.mulf %89, %90 : vector<8x128xf32>
    %cst_26 = arith.constant dense<0.000000e+00> : vector<8xf32>
    %92 = vector.multi_reduction <add>, %91, %cst_26 [1] : vector<8x128xf32> to vector<8xf32>
    %93 = vector.shape_cast %92 : vector<8xf32> to vector<8x1xf32>
    %cst_27 = arith.constant 3.125000e-02 : f32
    %94 = vector.broadcast %cst_27 : f32 to vector<8x1xf32>
    %95 = arith.mulf %93, %94 : vector<8x1xf32>
    %96 = vector.broadcast %95 : vector<8x1xf32> to vector<8x128xf32>
    %97 = arith.subf %91, %96 : vector<8x128xf32>
    %98 = vector.broadcast %18 : vector<1x128xf32> to vector<8x128xf32>
    %99 = arith.mulf %97, %98 : vector<8x128xf32>
    %100 = arith.mulf %99, %99 : vector<8x128xf32>
    %cst_28 = arith.constant dense<0.000000e+00> : vector<8xf32>
    %101 = vector.multi_reduction <add>, %100, %cst_28 [1] : vector<8x128xf32> to vector<8xf32>
    %102 = vector.shape_cast %101 : vector<8xf32> to vector<8x1xf32>
    %cst_29 = arith.constant 3.125000e-02 : f32
    %103 = vector.broadcast %cst_29 : f32 to vector<8x1xf32>
    %104 = arith.mulf %102, %103 : vector<8x1xf32>
    %cst_30 = arith.constant 9.99999974E-6 : f32
    %105 = vector.broadcast %cst_30 : f32 to vector<8x1xf32>
    %106 = arith.addf %104, %105 : vector<8x1xf32>
    %107 = math.rsqrt %106 : vector<8x1xf32>
    %108 = vector.broadcast %107 : vector<8x1xf32> to vector<8x128xf32>
    %109 = arith.mulf %99, %108 : vector<8x128xf32>
    %110 = vector.broadcast %12 : vector<1x128xf32> to vector<8x128xf32>
    %111 = arith.mulf %109, %110 : vector<8x128xf32>
    %112 = vector.broadcast %13 : vector<1x128xf32> to vector<8x128xf32>
    %113 = arith.addf %111, %112 : vector<8x128xf32>
    %cst_31 = arith.constant 5.000000e-01 : f32
    %114 = vector.broadcast %cst_31 : f32 to vector<8x128xf32>
    %115 = arith.mulf %114, %113 : vector<8x128xf32>
    %116 = math.tanh %115 : vector<8x128xf32>
    %cst_32 = arith.constant 5.000000e-01 : f32
    %117 = vector.broadcast %cst_32 : f32 to vector<8x128xf32>
    %118 = arith.mulf %117, %116 : vector<8x128xf32>
    %cst_33 = arith.constant 5.000000e-01 : f32
    %119 = vector.broadcast %cst_33 : f32 to vector<8x128xf32>
    %120 = arith.addf %118, %119 : vector<8x128xf32>
    %121 = vector.extract_strided_slice %5 {offsets = [0, 384], sizes = [8, 128], strides = [1, 1]} : vector<8x512xf32> to vector<8x128xf32>
    %122 = vector.broadcast %7 : vector<1x128xf32> to vector<8x128xf32>
    %123 = arith.addf %121, %122 : vector<8x128xf32>
    %124 = vector.extract_strided_slice %2 {offsets = [0, 384], sizes = [8, 128], strides = [1, 1]} : vector<8x640xf32> to vector<8x128xf32>
    %125 = arith.mulf %52, %123 : vector<8x128xf32>
    %126 = arith.addf %124, %125 : vector<8x128xf32>
    %127 = math.tanh %126 : vector<8x128xf32>
    %128 = vector.extract_strided_slice %2 {offsets = [0, 512], sizes = [8, 128], strides = [1, 1]} : vector<8x640xf32> to vector<8x128xf32>
    %129 = arith.mulf %120, %128 : vector<8x128xf32>
    %130 = arith.addf %127, %129 : vector<8x128xf32>
    %c0_34 = arith.constant 0 : index
    %c0_35 = arith.constant 0 : index
    %131 = vector.load %arg2[%c0_34, %c0_35] : memref<8x128xf32, #tpu.memory_space<vmem>>, vector<8x128xf32>
    %cst_36 = arith.constant 1.000000e+00 : f32
    %132 = vector.broadcast %cst_36 : f32 to vector<8x128xf32>
    %133 = arith.subf %132, %86 : vector<8x128xf32>
    %134 = arith.mulf %133, %131 : vector<8x128xf32>
    %135 = arith.mulf %86, %130 : vector<8x128xf32>
    %136 = arith.addf %134, %135 : vector<8x128xf32>
    %c0_37 = arith.constant 0 : index
    %c0_38 = arith.constant 0 : index
    %137 = vector.load %arg6[%c0_37, %c0_38] : memref<8x128xf32, #tpu.memory_space<vmem>>, vector<8x128xf32>
    tpu.vector_store %arg6[%c0_37, %c0_38], %136 {strides = array<i32>} : memref<8x128xf32, #tpu.memory_space<vmem>>, vector<8x128xf32>,
    return
  }
  func.func @transform_0(%arg0: i32) -> (i32, i32) {
    %c0_i32 = arith.constant 0 : i32
    %c0_i32_0 = arith.constant 0 : i32
    return %arg0, %c0_i32 : i32, i32
  }
  func.func @transform_1(%arg0: i32) -> (i32, i32) {
    %c0_i32 = arith.constant 0 : i32
    %c0_i32_0 = arith.constant 0 : i32
    return %arg0, %c0_i32 : i32, i32
  }
  func.func @transform_2(%arg0: i32) -> (i32, i32) {
    %c0_i32 = arith.constant 0 : i32
    %c0_i32_0 = arith.constant 0 : i32
    %c0_i32_1 = arith.constant 0 : i32
    return %c0_i32, %c0_i32_0 : i32, i32
  }
  func.func @transform_3(%arg0: i32) -> (i32, i32) {
    %c0_i32 = arith.constant 0 : i32
    %c0_i32_0 = arith.constant 0 : i32
    %c0_i32_1 = arith.constant 0 : i32
    return %c0_i32, %c0_i32_0 : i32, i32
  }
  func.func @transform_4(%arg0: i32) -> (i32, i32) {
    %c0_i32 = arith.constant 0 : i32
    %c0_i32_0 = arith.constant 0 : i32
    %c0_i32_1 = arith.constant 0 : i32
    return %c0_i32, %c0_i32_0 : i32, i32
  }
  func.func @transform_5(%arg0: i32) -> (i32, i32) {
    %c0_i32 = arith.constant 0 : i32
    %c0_i32_0 = arith.constant 0 : i32
    return %arg0, %c0_i32 : i32, i32
  }
}

</mosaic_0001>

<llo_original>
// kernel: linear_enhanced_gru.1
$region0: #{linear_enhanced_gru.1}
  #allocation0 [shape = 'u32[]', space=smem, size = 0x4, offset = 0x4, fixed_abs, tag = 'smem constant byte address 0x4 - core index']
  #allocation1 [shape = 'u32[144,128]{1,0:T(1,128)}', space=vmem, size = 0x12000, scoped, tag = 'internal scratch']
  %s0 = inlined_call_operand.vmem [shape: f32[8,16], index: 0, kind: input, shape index: {}]
  %s1 = inlined_call_operand.vmem [shape: f32[8,128], index: 1, kind: input, shape index: {}]
  %s2 = inlined_call_operand.hbm [shape: f32[16,640], index: 2, kind: input, shape index: {}]
  %s3 = inlined_call_operand.hbm [shape: f32[128,512], index: 3, kind: input, shape index: {}]
  %s4 = inlined_call_operand.vmem [shape: f32[8,128], index: 4, kind: input, shape index: {}]
  %s5 = inlined_call_operand.hbm [shape: f32[8,128], index: 5, kind: output, shape index: {}]
  %s6 = sld [smem:[#allocation0]]
  $region38: #{linear_enhanced_gru.1} parent=0
    _
  %s8 = ssub.s32 1, %s6
  %s9 = scalar_select 0, %s8, %s6
  $region1: #{linear_enhanced_gru.1} parent=0
    #allocation2 [shape = 'u8[40960]{0}', space=vmem, size = 0xa000, scoped, tag = 'input window, operand 2, single buffered']
    #allocation3 [shape = 's32[1]{0}', space=sflag, size = 0x4, scoped, tag = 'scoped memory for linear_enhanced_gru.1']
    #allocation4 [shape = 's32[1]{0}', space=sflag, size = 0x4, scoped, tag = 'scoped memory for linear_enhanced_gru.1']
    #allocation5 [shape = 'u8[262144]{0}', space=vmem, size = 0x40000, scoped, tag = 'input window, operand 3, single buffered']
    #allocation6 [shape = 's32[1]{0}', space=sflag, size = 0x4, scoped, tag = 'scoped memory for linear_enhanced_gru.1']
    #allocation7 [shape = 'u8[4096]{0}', space=vmem, size = 0x1000, scoped, tag = 'output window, operand 0, single buffered']
    %10 = vsyncpa [#allocation3], 0
    %11 = vsyncpa [#allocation6], 0
    %12 = vsyncpa [#allocation4], 0
    // Predicated region
    $region2: #{linear_enhanced_gru.1} parent=1 // pred_check
      _
    $region3: #{linear_enhanced_gru.1} parent=1 // pred_check_branch
      %14 = sbr.rel (0) target = $region5
    $region4: #{linear_enhanced_gru.1} parent=1 // pred_region
      _
    $region5: #{linear_enhanced_gru.1} parent=1 // pred_fallthru
      _
    // Predicated region
    $region6: #{linear_enhanced_gru.1} parent=1 // pred_check
      _
    $region7: #{linear_enhanced_gru.1} parent=1 // pred_check_branch
      %16 = sbr.rel (0) target = $region9
    $region8: #{linear_enhanced_gru.1} parent=1 // pred_region
      _
    $region9: #{linear_enhanced_gru.1} parent=1 // pred_fallthru
      _
    // Predicated region
    $region10: #{linear_enhanced_gru.1} parent=1 // pred_check
      _
    $region11: #{linear_enhanced_gru.1} parent=1 // pred_check_branch
      %18 = sbr.rel (0) target = $region13
    $region12: #{linear_enhanced_gru.1} parent=1 // pred_region
      %s20 = ssub.s32 1280, 1280
      %21 = vsyncadd [#allocation3], %s20
      %s22 = sshll.u32 [#allocation2], 4
      %s23 = int_to_ptr.vmem [resolvable:$true] %s22
      %28 = dma.hbm_to_vmem [thread:$0]  %s2, 1280, %s23, [#allocation3], 640, 640, 40
    $region13: #{linear_enhanced_gru.1} parent=1 // pred_fallthru
      _
    // Predicated region
    $region14: #{linear_enhanced_gru.1} parent=1 // pred_check
      _
    $region15: #{linear_enhanced_gru.1} parent=1 // pred_check_branch
      %30 = sbr.rel (0) target = $region17
    $region16: #{linear_enhanced_gru.1} parent=1 // pred_region
      %s32 = ssub.s32 8192, 8192
      %33 = vsyncadd [#allocation6], %s32
      %s34 = sshll.u32 [#allocation5], 4
      %s35 = int_to_ptr.vmem [resolvable:$true] %s34
      %40 = dma.hbm_to_vmem [thread:$0]  %s3, 8192, %s35, [#allocation6], 512, 512, 32
    $region17: #{linear_enhanced_gru.1} parent=1 // pred_fallthru
      _
    // Predicated region
    $region18: #{linear_enhanced_gru.1} parent=1 // pred_check
      _
    $region19: #{linear_enhanced_gru.1} parent=1 // pred_check_branch
      %42 = sbr.rel (0) target = $region21
    $region20: #{linear_enhanced_gru.1} parent=1 // pred_region
      _
    $region21: #{linear_enhanced_gru.1} parent=1 // pred_fallthru
      _
    // Predicated region
    $region22: #{linear_enhanced_gru.1} parent=1 // pred_check
      _
    $region23: #{linear_enhanced_gru.1} parent=1 // pred_check_branch
      %44 = sbr.rel (0) target = $region25
    $region24: #{linear_enhanced_gru.1} parent=1 // pred_region
      %45 = dma.done [#allocation3], 1280
    $region25: #{linear_enhanced_gru.1} parent=1 // pred_fallthru
      _
    // Predicated region
    $region26: #{linear_enhanced_gru.1} parent=1 // pred_check
      _
    $region27: #{linear_enhanced_gru.1} parent=1 // pred_check_branch
      %47 = sbr.rel (0) target = $region29
    $region28: #{linear_enhanced_gru.1} parent=1 // pred_region
      %48 = dma.done [#allocation6], 8192
    $region29: #{linear_enhanced_gru.1} parent=1 // pred_fallthru
      _
    %v49 = vld [vmem:[%s0] sm:$0xff]
    %v50 = vld [vmem:[#allocation2] sm:$0xff]
    %v51 = vld [vmem:[#allocation2 + $0x8] sm:$0xff]
    %v52 = vld [vmem:[#allocation2 + $0x10] sm:$0xff]
    %v53 = vld [vmem:[#allocation2 + $0x18] sm:$0xff]
    %v54 = vld [vmem:[#allocation2 + $0x20] sm:$0xff]
    %v55 = vld [vmem:[#allocation2 + $0x28] sm:$0xff]
    %v56 = vld [vmem:[#allocation2 + $0x30] sm:$0xff]
    %v57 = vld [vmem:[#allocation2 + $0x38] sm:$0xff]
    %v58 = vld [vmem:[#allocation2 + $0x40] sm:$0xff]
    %v59 = vld [vmem:[#allocation2 + $0x48] sm:$0xff]
    %vm60 = vcmask 130048
    %v62 = vsel %vm60, %v49, 0
    %64 = vmatprep.subr.mxu0 %v51
    %65 = vmatpush1.msra.mxu0 %v50
    %66 = vmatprep.subr.mxu0 %v56
    %67 = vmatpush1.msra.mxu0 %v55
    %68 = vmatprep.subr.mxu0 0.0
    %69 = vmatpush1.msra.mxu0 0.0
    %70 = vmatprep.subr.mxu0 0.0
    %71 = vmatpush1.msra.mxu0 0.0
    %72 = vmatprep.subr.mxu0 0.0
    %73 = vmatpush1.msra.mxu0 0.0
    %74 = vmatprep.subr.mxu0 0.0
    %75 = vmatpush1.msra.mxu0 0.0
    %76 = vmatprep.subr.mxu0 0.0
    %77 = vmatpush1.msra.mxu0 0.0
    %78 = vmatprep.subr.mxu0 0.0
    %79 = vmatpush1.msra.mxu0 0.0
    %80 = vmatprep.subr.mxu0 0.0
    %81 = vmatpush1.msra.mxu0 0.0
    %82 = vmatprep.subr.mxu0 0.0
    %83 = vmatpush1.msra.mxu0 0.0
    %84 = vmatprep.subr.mxu0 0.0
    %85 = vmatpush1.msra.mxu0 0.0
    %86 = vmatprep.subr.mxu0 0.0
    %87 = vmatpush1.msra.mxu0 0.0
    %88 = vmatprep.subr.mxu0 0.0
    %89 = vmatpush1.msra.mxu0 0.0
    %90 = vmatprep.subr.mxu0 0.0
    %91 = vmatpush1.msra.mxu0 0.0
    %92 = vmatprep.subr.mxu0 0.0
    %93 = vmatpush1.msra.mxu0 0.0
    %94 = vmatprep.subr.mxu0 0.0
    %95 = vmatpush1.msra.mxu0 0.0
    %96 = vmatprep.subr.mxu0 0.0
    %97 = vmatpush1.msra.mxu0 0.0
    %98 = vmatprep.subr.mxu0 0.0
    %99 = vmatpush1.msra.mxu0 0.0
    %100 = vmatprep.subr.mxu0 0.0
    %101 = vmatpush1.msra.mxu0 0.0
    %102 = vmatprep.subr.mxu0 0.0
    %103 = vmatpush1.msra.mxu0 0.0
    %104 = vmatprep.subr.mxu0 0.0
    %105 = vmatpush1.msra.mxu0 0.0
    %106 = vmatprep.subr.mxu0 0.0
    %107 = vmatpush1.msra.mxu0 0.0
    %108 = vmatprep.subr.mxu0 0.0
    %109 = vmatpush1.msra.mxu0 0.0
    %110 = vmatprep.subr.mxu0 0.0
    %111 = vmatpush1.msra.mxu0 0.0
    %112 = vmatprep.subr.mxu0 0.0
    %113 = vmatpush1.msra.mxu0 0.0
    %114 = vmatprep.subr.mxu0 0.0
    %115 = vmatpush1.msra.mxu0 0.0
    %116 = vmatprep.subr.mxu0 0.0
    %117 = vmatpush1.msra.mxu0 0.0
    %118 = vmatprep.subr.mxu0 0.0
    %119 = vmatpush1.msra.mxu0 0.0
    %120 = vmatprep.subr.mxu0 0.0
    %121 = vmatpush1.msra.mxu0 0.0
    %122 = vmatprep.subr.mxu0 0.0
    %123 = vmatpush1.msra.mxu0 0.0
    %124 = vmatprep.subr.mxu0 0.0
    %125 = vmatpush1.msra.mxu0 0.0
    %126 = vmatprep.subr.mxu0 0.0
    %127 = vmatpush1.msra.mxu0 0.0
    %128 = vmatprep.mubr.f32.mxu0 0.0
    %129 = vmatmul.mubr.f32.gmra.mrb[0].mxu0 %v62
    %v130 = vpop.f32.mrb[0].mxu0
    %v131 = vadd.f32 0.0, %v130
    %v132 = vpop.f32.mrb[0].mxu0
    %v133 = vadd.f32 0.0, %v132
    %134 = vdwg.mxu0
    %135 = vmatprep.subr.mxu0 %v53
    %136 = vmatpush1.msra.mxu0 %v52
    %137 = vmatprep.subr.mxu0 %v58
    %138 = vmatpush1.msra.mxu0 %v57
    %139 = vmatprep.subr.mxu0 0.0
    %140 = vmatpush1.msra.mxu0 0.0
    %141 = vmatprep.subr.mxu0 0.0
    %142 = vmatpush1.msra.mxu0 0.0
    %143 = vmatprep.subr.mxu0 0.0
    %144 = vmatpush1.msra.mxu0 0.0
    %145 = vmatprep.subr.mxu0 0.0
    %146 = vmatpush1.msra.mxu0 0.0
    %147 = vmatprep.subr.mxu0 0.0
    %148 = vmatpush1.msra.mxu0 0.0
    %149 = vmatprep.subr.mxu0 0.0
    %150 = vmatpush1.msra.mxu0 0.0
    %151 = vmatprep.subr.mxu0 0.0
    %152 = vmatpush1.msra.mxu0 0.0
    %153 = vmatprep.subr.mxu0 0.0
    %154 = vmatpush1.msra.mxu0 0.0
    %155 = vmatprep.subr.mxu0 0.0
    %156 = vmatpush1.msra.mxu0 0.0
    %157 = vmatprep.subr.mxu0 0.0
    %158 = vmatpush1.msra.mxu0 0.0
    %159 = vmatprep.subr.mxu0 0.0
    %160 = vmatpush1.msra.mxu0 0.0
    %161 = vmatprep.subr.mxu0 0.0
    %162 = vmatpush1.msra.mxu0 0.0
    %163 = vmatprep.subr.mxu0 0.0
    %164 = vmatpush1.msra.mxu0 0.0
    %165 = vmatprep.subr.mxu0 0.0
    %166 = vmatpush1.msra.mxu0 0.0
    %167 = vmatprep.subr.mxu0 0.0
    %168 = vmatpush1.msra.mxu0 0.0
    %169 = vmatprep.subr.mxu0 0.0
    %170 = vmatpush1.msra.mxu0 0.0
    %171 = vmatprep.subr.mxu0 0.0
    %172 = vmatpush1.msra.mxu0 0.0
    %173 = vmatprep.subr.mxu0 0.0
    %174 = vmatpush1.msra.mxu0 0.0
    %175 = vmatprep.subr.mxu0 0.0
    %176 = vmatpush1.msra.mxu0 0.0
    %177 = vmatprep.subr.mxu0 0.0
    %178 = vmatpush1.msra.mxu0 0.0
    %179 = vmatprep.subr.mxu0 0.0
    %180 = vmatpush1.msra.mxu0 0.0
    %181 = vmatprep.subr.mxu0 0.0
    %182 = vmatpush1.msra.mxu0 0.0
    %183 = vmatprep.subr.mxu0 0.0
    %184 = vmatpush1.msra.mxu0 0.0
    %185 = vmatprep.subr.mxu0 0.0
    %186 = vmatpush1.msra.mxu0 0.0
    %187 = vmatprep.subr.mxu0 0.0
    %188 = vmatpush1.msra.mxu0 0.0
    %189 = vmatprep.subr.mxu0 0.0
    %190 = vmatpush1.msra.mxu0 0.0
    %191 = vmatprep.subr.mxu0 0.0
    %192 = vmatpush1.msra.mxu0 0.0
    %193 = vmatprep.subr.mxu0 0.0
    %194 = vmatpush1.msra.mxu0 0.0
    %195 = vmatprep.subr.mxu0 0.0
    %196 = vmatpush1.msra.mxu0 0.0
    %197 = vmatprep.subr.mxu0 0.0
    %198 = vmatpush1.msra.mxu0 0.0
    %199 = vmatprep.mubr.f32.mxu0 0.0
    %200 = vmatmul.mubr.f32.gmra.mrb[0].mxu0 %v62
    %v201 = vpop.f32.mrb[0].mxu0
    %v202 = vadd.f32 0.0, %v201
    %v203 = vpop.f32.mrb[0].mxu0
    %v204 = vadd.f32 0.0, %v203
    %205 = vdwg.mxu0
    %206 = vmatprep.subr.mxu0 0.0
    %207 = vmatpush1.msra.mxu0 %v54
    %208 = vmatprep.subr.mxu0 0.0
    %209 = vmatpush1.msra.mxu0 %v59
    %210 = vmatprep.subr.mxu0 0.0
    %211 = vmatpush1.msra.mxu0 0.0
    %212 = vmatprep.subr.mxu0 0.0
    %213 = vmatpush1.msra.mxu0 0.0
    %214 = vmatprep.subr.mxu0 0.0
    %215 = vmatpush1.msra.mxu0 0.0
    %216 = vmatprep.subr.mxu0 0.0
    %217 = vmatpush1.msra.mxu0 0.0
    %218 = vmatprep.subr.mxu0 0.0
    %219 = vmatpush1.msra.mxu0 0.0
    %220 = vmatprep.subr.mxu0 0.0
    %221 = vmatpush1.msra.mxu0 0.0
    %222 = vmatprep.subr.mxu0 0.0
    %223 = vmatpush1.msra.mxu0 0.0
    %224 = vmatprep.subr.mxu0 0.0
    %225 = vmatpush1.msra.mxu0 0.0
    %226 = vmatprep.subr.mxu0 0.0
    %227 = vmatpush1.msra.mxu0 0.0
    %228 = vmatprep.subr.mxu0 0.0
    %229 = vmatpush1.msra.mxu0 0.0
    %230 = vmatprep.subr.mxu0 0.0
    %231 = vmatpush1.msra.mxu0 0.0
    %232 = vmatprep.subr.mxu0 0.0
    %233 = vmatpush1.msra.mxu0 0.0
    %234 = vmatprep.subr.mxu0 0.0
    %235 = vmatpush1.msra.mxu0 0.0
    %236 = vmatprep.subr.mxu0 0.0
    %237 = vmatpush1.msra.mxu0 0.0
    %238 = vmatprep.subr.mxu0 0.0
    %239 = vmatpush1.msra.mxu0 0.0
    %240 = vmatprep.subr.mxu0 0.0
    %241 = vmatpush1.msra.mxu0 0.0
    %242 = vmatprep.subr.mxu0 0.0
    %243 = vmatpush1.msra.mxu0 0.0
    %244 = vmatprep.subr.mxu0 0.0
    %245 = vmatpush1.msra.mxu0 0.0
    %246 = vmatprep.subr.mxu0 0.0
    %247 = vmatpush1.msra.mxu0 0.0
    %248 = vmatprep.subr.mxu0 0.0
    %249 = vmatpush1.msra.mxu0 0.0
    %250 = vmatprep.subr.mxu0 0.0
    %251 = vmatpush1.msra.mxu0 0.0
    %252 = vmatprep.subr.mxu0 0.0
    %253 = vmatpush1.msra.mxu0 0.0
    %254 = vmatprep.subr.mxu0 0.0
    %255 = vmatpush1.msra.mxu0 0.0
    %256 = vmatprep.subr.mxu0 0.0
    %257 = vmatpush1.msra.mxu0 0.0
    %258 = vmatprep.subr.mxu0 0.0
    %259 = vmatpush1.msra.mxu0 0.0
    %260 = vmatprep.subr.mxu0 0.0
    %261 = vmatpush1.msra.mxu0 0.0
    %262 = vmatprep.subr.mxu0 0.0
    %263 = vmatpush1.msra.mxu0 0.0
    %264 = vmatprep.subr.mxu0 0.0
    %265 = vmatpush1.msra.mxu0 0.0
    %266 = vmatprep.subr.mxu0 0.0
    %267 = vmatpush1.msra.mxu0 0.0
    %268 = vmatprep.subr.mxu0 0.0
    %269 = vmatpush1.msra.mxu0 0.0
    %270 = vmatprep.mubr.f32.mxu0 0.0
    %271 = vmatmul.mubr.f32.gmra.mrb[0].mxu0 %v62
    %v272 = vpop.f32.mrb[0].mxu0
    %v273 = vadd.f32 0.0, %v272
    %v274 = vpop.f32.mrb[0].mxu0
    %275 = vdwg.mxu0
    %v276 = vld [vmem:[%s1] sm:$0xff]
    %v277 = vld [vmem:[#allocation5] sm:$0xff]
    %v278 = vld [vmem:[#allocation5 + $0x8] sm:$0xff]
    %v279 = vld [vmem:[#allocation5 + $0x10] sm:$0xff]
    %v280 = vld [vmem:[#allocation5 + $0x18] sm:$0xff]
    %v281 = vld [vmem:[#allocation5 + $0x20] sm:$0xff]
    %v282 = vld [vmem:[#allocation5 + $0x28] sm:$0xff]
    %v283 = vld [vmem:[#allocation5 + $0x30] sm:$0xff]
    %v284 = vld [vmem:[#allocation5 + $0x38] sm:$0xff]
    %v285 = vld [vmem:[#allocation5 + $0x40] sm:$0xff]
    %v286 = vld [vmem:[#allocation5 + $0x48] sm:$0xff]
    %v287 = vld [vmem:[#allocation5 + $0x50] sm:$0xff]
    %v288 = vld [vmem:[#allocation5 + $0x58] sm:$0xff]
    %v289 = vld [vmem:[#allocation5 + $0x60] sm:$0xff]
    %v290 = vld [vmem:[#allocation5 + $0x68] sm:$0xff]
    %v291 = vld [vmem:[#allocation5 + $0x70] sm:$0xff]
    %v292 = vld [vmem:[#allocation5 + $0x78] sm:$0xff]
    %v293 = vld [vmem:[#allocation5 + $0x80] sm:$0xff]
    %v294 = vld [vmem:[#allocation5 + $0x88] sm:$0xff]
    %v295 = vld [vmem:[#allocation5 + $0x90] sm:$0xff]
    %v296 = vld [vmem:[#allocation5 + $0x98] sm:$0xff]
    %v297 = vld [vmem:[#allocation5 + $0xa0] sm:$0xff]
    %v298 = vld [vmem:[#allocation5 + $0xa8] sm:$0xff]
    %v299 = vld [vmem:[#allocation5 + $0xb0] sm:$0xff]
    %v300 = vld [vmem:[#allocation5 + $0xb8] sm:$0xff]
    %v301 = vld [vmem:[#allocation5 + $0xc0] sm:$0xff]
    %v302 = vld [vmem:[#allocation5 + $0xc8] sm:$0xff]
    %v303 = vld [vmem:[#allocation5 + $0xd0] sm:$0xff]
    %v304 = vld [vmem:[#allocation5 + $0xd8] sm:$0xff]
    %v305 = vld [vmem:[#allocation5 + $0xe0] sm:$0xff]
    %v306 = vld [vmem:[#allocation5 + $0xe8] sm:$0xff]
    %v307 = vld [vmem:[#allocation5 + $0xf0] sm:$0xff]
    %v308 = vld [vmem:[#allocation5 + $0xf8] sm:$0xff]
    %v309 = vld [vmem:[#allocation5 + $0x100] sm:$0xff]
    %v310 = vld [vmem:[#allocation5 + $0x108] sm:$0xff]
    %v311 = vld [vmem:[#allocation5 + $0x110] sm:$0xff]
    %v312 = vld [vmem:[#allocation5 + $0x118] sm:$0xff]
    %v313 = vld [vmem:[#allocation5 + $0x120] sm:$0xff]
    %v314 = vld [vmem:[#allocation5 + $0x128] sm:$0xff]
    %v315 = vld [vmem:[#allocation5 + $0x130] sm:$0xff]
    %v316 = vld [vmem:[#allocation5 + $0x138] sm:$0xff]
    %v317 = vld [vmem:[#allocation5 + $0x140] sm:$0xff]
    %v318 = vld [vmem:[#allocation5 + $0x148] sm:$0xff]
    %v319 = vld [vmem:[#allocation5 + $0x150] sm:$0xff]
    %v320 = vld [vmem:[#allocation5 + $0x158] sm:$0xff]
    %v321 = vld [vmem:[#allocation5 + $0x160] sm:$0xff]
    %v322 = vld [vmem:[#allocation5 + $0x168] sm:$0xff]
    %v323 = vld [vmem:[#allocation5 + $0x170] sm:$0xff]
    %v324 = vld [vmem:[#allocation5 + $0x178] sm:$0xff]
    %v325 = vld [vmem:[#allocation5 + $0x180] sm:$0xff]
    %v326 = vld [vmem:[#allocation5 + $0x188] sm:$0xff]
    %v327 = vld [vmem:[#allocation5 + $0x190] sm:$0xff]
    %v328 = vld [vmem:[#allocation5 + $0x198] sm:$0xff]
    %v329 = vld [vmem:[#allocation5 + $0x1a0] sm:$0xff]
    %v330 = vld [vmem:[#allocation5 + $0x1a8] sm:$0xff]
    %v331 = vld [vmem:[#allocation5 + $0x1b0] sm:$0xff]
    %v332 = vld [vmem:[#allocation5 + $0x1b8] sm:$0xff]
    %v333 = vld [vmem:[#allocation5 + $0x1c0] sm:$0xff]
    %v334 = vld [vmem:[#allocation5 + $0x1c8] sm:$0xff]
    %v335 = vld [vmem:[#allocation5 + $0x1d0] sm:$0xff]
    %v336 = vld [vmem:[#allocation5 + $0x1d8] sm:$0xff]
    %v337 = vld [vmem:[#allocation5 + $0x1e0] sm:$0xff]
    %v338 = vld [vmem:[#allocation5 + $0x1e8] sm:$0xff]
    %v339 = vld [vmem:[#allocation5 + $0x1f0] sm:$0xff]
    %v340 = vld [vmem:[#allocation5 + $0x1f8] sm:$0xff]
    %341 = vmatprep.subr.mxu0 %v278
    %342 = vmatpush1.msra.mxu0 %v277
    %343 = vmatprep.subr.mxu0 %v282
    %344 = vmatpush1.msra.mxu0 %v281
    %345 = vmatprep.subr.mxu0 %v286
    %346 = vmatpush1.msra.mxu0 %v285
    %347 = vmatprep.subr.mxu0 %v290
    %348 = vmatpush1.msra.mxu0 %v289
    %349 = vmatprep.subr.mxu0 %v294
    %350 = vmatpush1.msra.mxu0 %v293
    %351 = vmatprep.subr.mxu0 %v298
    %352 = vmatpush1.msra.mxu0 %v297
    %353 = vmatprep.subr.mxu0 %v302
    %354 = vmatpush1.msra.mxu0 %v301
    %355 = vmatprep.subr.mxu0 %v306
    %356 = vmatpush1.msra.mxu0 %v305
    %357 = vmatprep.subr.mxu0 %v310
    %358 = vmatpush1.msra.mxu0 %v309
    %359 = vmatprep.subr.mxu0 %v314
    %360 = vmatpush1.msra.mxu0 %v313
    %361 = vmatprep.subr.mxu0 %v318
    %362 = vmatpush1.msra.mxu0 %v317
    %363 = vmatprep.subr.mxu0 %v322
    %364 = vmatpush1.msra.mxu0 %v321
    %365 = vmatprep.subr.mxu0 %v326
    %366 = vmatpush1.msra.mxu0 %v325
    %367 = vmatprep.subr.mxu0 %v330
    %368 = vmatpush1.msra.mxu0 %v329
    %369 = vmatprep.subr.mxu0 %v334
    %370 = vmatpush1.msra.mxu0 %v333
    %371 = vmatprep.subr.mxu0 %v338
    %372 = vmatpush1.msra.mxu0 %v337
    %373 = vmatprep.subr.mxu0 0.0
    %374 = vmatpush1.msra.mxu0 0.0
    %375 = vmatprep.subr.mxu0 0.0
    %376 = vmatpush1.msra.mxu0 0.0
    %377 = vmatprep.subr.mxu0 0.0
    %378 = vmatpush1.msra.mxu0 0.0
    %379 = vmatprep.subr.mxu0 0.0
    %380 = vmatpush1.msra.mxu0 0.0
    %381 = vmatprep.subr.mxu0 0.0
    %382 = vmatpush1.msra.mxu0 0.0
    %383 = vmatprep.subr.mxu0 0.0
    %384 = vmatpush1.msra.mxu0 0.0
    %385 = vmatprep.subr.mxu0 0.0
    %386 = vmatpush1.msra.mxu0 0.0
    %387 = vmatprep.subr.mxu0 0.0
    %388 = vmatpush1.msra.mxu0 0.0
    %389 = vmatprep.subr.mxu0 0.0
    %390 = vmatpush1.msra.mxu0 0.0
    %391 = vmatprep.subr.mxu0 0.0
    %392 = vmatpush1.msra.mxu0 0.0
    %393 = vmatprep.subr.mxu0 0.0
    %394 = vmatpush1.msra.mxu0 0.0
    %395 = vmatprep.subr.mxu0 0.0
    %396 = vmatpush1.msra.mxu0 0.0
    %397 = vmatprep.subr.mxu0 0.0
    %398 = vmatpush1.msra.mxu0 0.0
    %399 = vmatprep.subr.mxu0 0.0
    %400 = vmatpush1.msra.mxu0 0.0
    %401 = vmatprep.subr.mxu0 0.0
    %402 = vmatpush1.msra.mxu0 0.0
    %403 = vmatprep.subr.mxu0 0.0
    %404 = vmatpush1.msra.mxu0 0.0
    %405 = vmatprep.mubr.f32.mxu0 0.0
    %406 = vmatmul.mubr.f32.gmra.mrb[0].mxu0 %v276
    %v407 = vpop.f32.mrb[0].mxu0
    %v408 = vadd.f32 0.0, %v407
    %v409 = vpop.f32.mrb[0].mxu0
    %v410 = vadd.f32 0.0, %v409
    %411 = vdwg.mxu0
    %412 = vmatprep.subr.mxu0 %v280
    %413 = vmatpush1.msra.mxu0 %v279
    %414 = vmatprep.subr.mxu0 %v284
    %415 = vmatpush1.msra.mxu0 %v283
    %416 = vmatprep.subr.mxu0 %v288
    %417 = vmatpush1.msra.mxu0 %v287
    %418 = vmatprep.subr.mxu0 %v292
    %419 = vmatpush1.msra.mxu0 %v291
    %420 = vmatprep.subr.mxu0 %v296
    %421 = vmatpush1.msra.mxu0 %v295
    %422 = vmatprep.subr.mxu0 %v300
    %423 = vmatpush1.msra.mxu0 %v299
    %424 = vmatprep.subr.mxu0 %v304
    %425 = vmatpush1.msra.mxu0 %v303
    %426 = vmatprep.subr.mxu0 %v308
    %427 = vmatpush1.msra.mxu0 %v307
    %428 = vmatprep.subr.mxu0 %v312
    %429 = vmatpush1.msra.mxu0 %v311
    %430 = vmatprep.subr.mxu0 %v316
    %431 = vmatpush1.msra.mxu0 %v315
    %432 = vmatprep.subr.mxu0 %v320
    %433 = vmatpush1.msra.mxu0 %v319
    %434 = vmatprep.subr.mxu0 %v324
    %435 = vmatpush1.msra.mxu0 %v323
    %436 = vmatprep.subr.mxu0 %v328
    %437 = vmatpush1.msra.mxu0 %v327
    %438 = vmatprep.subr.mxu0 %v332
    %439 = vmatpush1.msra.mxu0 %v331
    %440 = vmatprep.subr.mxu0 %v336
    %441 = vmatpush1.msra.mxu0 %v335
    %442 = vmatprep.subr.mxu0 %v340
    %443 = vmatpush1.msra.mxu0 %v339
    %444 = vmatprep.subr.mxu0 0.0
    %445 = vmatpush1.msra.mxu0 0.0
    %446 = vmatprep.subr.mxu0 0.0
    %447 = vmatpush1.msra.mxu0 0.0
    %448 = vmatprep.subr.mxu0 0.0
    %449 = vmatpush1.msra.mxu0 0.0
    %450 = vmatprep.subr.mxu0 0.0
    %451 = vmatpush1.msra.mxu0 0.0
    %452 = vmatprep.subr.mxu0 0.0
    %453 = vmatpush1.msra.mxu0 0.0
    %454 = vmatprep.subr.mxu0 0.0
    %455 = vmatpush1.msra.mxu0 0.0
    %456 = vmatprep.subr.mxu0 0.0
    %457 = vmatpush1.msra.mxu0 0.0
    %458 = vmatprep.subr.mxu0 0.0
    %459 = vmatpush1.msra.mxu0 0.0
    %460 = vmatprep.subr.mxu0 0.0
    %461 = vmatpush1.msra.mxu0 0.0
    %462 = vmatprep.subr.mxu0 0.0
    %463 = vmatpush1.msra.mxu0 0.0
    %464 = vmatprep.subr.mxu0 0.0
    %465 = vmatpush1.msra.mxu0 0.0
    %466 = vmatprep.subr.mxu0 0.0
    %467 = vmatpush1.msra.mxu0 0.0
    %468 = vmatprep.subr.mxu0 0.0
    %469 = vmatpush1.msra.mxu0 0.0
    %470 = vmatprep.subr.mxu0 0.0
    %471 = vmatpush1.msra.mxu0 0.0
    %472 = vmatprep.subr.mxu0 0.0
    %473 = vmatpush1.msra.mxu0 0.0
    %474 = vmatprep.subr.mxu0 0.0
    %475 = vmatpush1.msra.mxu0 0.0
    %476 = vmatprep.mubr.f32.mxu0 0.0
    %477 = vmatmul.mubr.f32.gmra.mrb[0].mxu0 %v276
    %v478 = vpop.f32.mrb[0].mxu0
    %v479 = vadd.f32 0.0, %v478
    %v480 = vpop.f32.mrb[0].mxu0
    %v481 = vadd.f32 0.0, %v480
    %482 = vdwg.mxu0
    %v483 = vld [vmem:[%s4] sm:$0xff]
    %v484 = vlaneseq
    %v485 = vand.u32 %v484, 127
    %vm486 = vcmp.lt.s32.totalorder %v485, 32
    %v487 = vsel %vm486, 1, 0
    %v488 = vcvt.s32.f32 %v487
    %v489 = vadd.f32 %v131, %v408
    %v490 = vmul.f32 %v489, %v488
    %491 = vadd.xlane.f32.xlu0 %v490
    %v492 = vpop.xlane.xlu0 %491
    %v493 = vmul.f32 %v492, 0.03125
    %v494 = vsub.f32 %v490, %v493
    %v495 = vmul.f32 %v494, %v488
    %v496 = vmul.f32 %v495, %v495
    %497 = vadd.xlane.f32.xlu0 %v496
    %v498 = vpop.xlane.xlu0 %497
    %v499 = vmul.f32 %v498, 0.03125
    %v500 = vadd.f32 %v499, 1e-05
    %v501 = vrsqrt.pop %v500
    %v502 = vmul.f32 %v495, %v501
    %v503 = vlaneseq
    %v504 = vshrl.u32 %v503, 7
    %v505 = vsub.s32 1, %v504
    %v506 = vrot.slane %v483, %v505
    %v507 = vmul.f32 %v502, %v506
    %v508 = vlaneseq
    %v509 = vshrl.u32 %v508, 7
    %v510 = vsub.s32 2, %v509
    %v511 = vrot.slane %v483, %v510
    %v512 = vadd.f32 %v507, %v511
    %v513 = vmul.f32 %v512, 0.5
    %v514 = vtanh.pop %v513
    %v515 = vmul.f32 %v514, 0.5
    %v516 = vadd.f32 %v515, 0.5
    %v517 = vadd.f32 %v133, %v410
    %v518 = vmul.f32 %v517, %v488
    %519 = vadd.xlane.f32.xlu0 %v518
    %v520 = vpop.xlane.xlu0 %519
    %v521 = vmul.f32 %v520, 0.03125
    %v522 = vsub.f32 %v518, %v521
    %v523 = vmul.f32 %v522, %v488
    %v524 = vmul.f32 %v523, %v523
    %525 = vadd.xlane.f32.xlu0 %v524
    %v526 = vpop.xlane.xlu0 %525
    %v527 = vmul.f32 %v526, 0.03125
    %v528 = vadd.f32 %v527, 1e-05
    %v529 = vrsqrt.pop %v528
    %v530 = vmul.f32 %v523, %v529
    %v531 = vlaneseq
    %v532 = vshrl.u32 %v531, 7
    %v533 = vsub.s32 3, %v532
    %v534 = vrot.slane %v483, %v533
    %v535 = vmul.f32 %v530, %v534
    %v536 = vlaneseq
    %v537 = vshrl.u32 %v536, 7
    %v538 = vsub.s32 4, %v537
    %v539 = vrot.slane %v483, %v538
    %v540 = vadd.f32 %v535, %v539
    %v541 = vmul.f32 %v540, 0.5
    %v542 = vtanh.pop %v541
    %v543 = vmul.f32 %v542, 0.5
    %v544 = vadd.f32 %v543, 0.5
    %v545 = vadd.f32 %v202, %v479
    %v546 = vmul.f32 %v545, %v488
    %547 = vadd.xlane.f32.xlu0 %v546
    %v548 = vpop.xlane.xlu0 %547
    %v549 = vmul.f32 %v548, 0.03125
    %v550 = vsub.f32 %v546, %v549
    %v551 = vmul.f32 %v550, %v488
    %v552 = vmul.f32 %v551, %v551
    %553 = vadd.xlane.f32.xlu0 %v552
    %v554 = vpop.xlane.xlu0 %553
    %v555 = vmul.f32 %v554, 0.03125
    %v556 = vadd.f32 %v555, 1e-05
    %v557 = vrsqrt.pop %v556
    %v558 = vmul.f32 %v551, %v557
    %v559 = vlaneseq
    %v560 = vshrl.u32 %v559, 7
    %v561 = vsub.s32 5, %v560
    %v562 = vrot.slane %v483, %v561
    %v563 = vmul.f32 %v558, %v562
    %v564 = vlaneseq
    %v565 = vshrl.u32 %v564, 7
    %v566 = vsub.s32 6, %v565
    %v567 = vrot.slane %v483, %v566
    %v568 = vadd.f32 %v563, %v567
    %v569 = vmul.f32 %v568, 0.5
    %v570 = vtanh.pop %v569
    %v571 = vmul.f32 %v570, 0.5
    %v572 = vadd.f32 %v571, 0.5
    %v573 = vlaneseq
    %v574 = vshrl.u32 %v573, 7
    %v575 = vsub.s32 0, %v574
    %v576 = vrot.slane %v483, %v575
    %v577 = vadd.f32 %v481, %v576
    %v578 = vmul.f32 %v516, %v577
    %v579 = vadd.f32 %v204, %v578
    %v580 = vtanh.pop %v579
    %v581 = vmul.f32 %v572, %v273
    %v582 = vadd.f32 %v580, %v581
    %v583 = vsub.f32 1.0, %v544
    %v584 = vmul.f32 %v583, %v276
    %v585 = vmul.f32 %v544, %v582
    %v586 = vadd.f32 %v584, %v585
    %587 = vst [vmem:[#allocation7] sm:$0xff] %v586
    // Predicated region
    $region30: #{linear_enhanced_gru.1} parent=1 // pred_check
      _
    $region31: #{linear_enhanced_gru.1} parent=1 // pred_check_branch
      %589 = sbr.rel (0) target = $region33
    $region32: #{linear_enhanced_gru.1} parent=1 // pred_region
      %s591 = ssub.s32 128, 128
      %592 = vsyncadd [#allocation4], %s591
      %s594 = sshll.u32 [#allocation7], 4
      %s595 = int_to_ptr.vmem [resolvable:$true] %s594
      %597 = dma.vmem_to_hbm [thread:$0]  %s595, 128, %s5, [#allocation4]
    $region33: #{linear_enhanced_gru.1} parent=1 // pred_fallthru
      _
    // Predicated region
    $region34: #{linear_enhanced_gru.1} parent=1 // pred_check
      _
    $region35: #{linear_enhanced_gru.1} parent=1 // pred_check_branch
      %599 = sbr.rel (0) target = $region37
    $region36: #{linear_enhanced_gru.1} parent=1 // pred_region
      %600 = dma.done [#allocation4], 128
    $region37: #{linear_enhanced_gru.1} parent=1 // pred_fallthru
      _
    %601 = vsyncpa [#allocation3], 1
    %602 = vsyncpa [#allocation6], 1
    %603 = vsyncpa [#allocation4], 1

</llo_original>
